<compile_context>
chip_gen: v7x
topology: tpu7x:2x2x1
jax: 0.10.0
libtpu: 0.0.40
codegen_flags: <defaults>
</compile_context>

<pallas_src>
import functools

import jax
import jax.numpy as jnp
from jax import lax
from jax.experimental import pallas as pl
from jax.experimental.pallas import tpu as pltpu

LANE = 128
CHUNK_ROWS = 256          # rows folded per inner step (32 f32 vregs per input)
MAX_TM = 4096             # rows per grid step (multiple of CHUNK_ROWS)


def _round_down8(x):
    return (x // 8) * 8


def _fold8(x):
    """Reduce (r, LANE) f32 -> (8, LANE) partial sums.

    For r a multiple of 8 this is a pure cross-vreg VALU reduction (each
    (8, LANE) slice of the reshape is exactly one vreg); otherwise falls back
    to a one-off sublane (XLU) reduce placed in row 0.
    """
    r = x.shape[0]
    if r >= 8 and r % 8 == 0:
        return x.reshape(r // 8, 8, LANE).sum(axis=0)
    s = jnp.sum(x, axis=0, keepdims=True)                       # (1, LANE)
    row0 = lax.broadcasted_iota(jnp.int32, (8, LANE), 0) == 0
    return jnp.where(row0, s, 0.0)


def _pnloss_kernel(conf_ref, lab_ref, out_ref,
                   acc_sp_ref, acc_lab_ref, acc_conf_ref,
                   *, n_elems, tm, chunk, needs_mask):
    i = pl.program_id(0)

    @pl.when(i == 0)
    def _init():
        acc_sp_ref[...] = jnp.zeros_like(acc_sp_ref)
        acc_lab_ref[...] = jnp.zeros_like(acc_lab_ref)
        acc_conf_ref[...] = jnp.zeros_like(acc_conf_ref)

    base_elem = i * (tm * LANE)   # flat element index of this block's first element

    def process(r0, rows):
        lab = lab_ref[pl.ds(r0, rows), :].astype(jnp.float32)
        conf = conf_ref[pl.ds(r0, rows), :].astype(jnp.float32)
        # Numerically stable softplus(-lab) = max(-lab, 0) + log1p(exp(-|lab|)).
        sp_neg = jnp.log1p(jnp.exp(-jnp.abs(lab))) + jnp.maximum(-lab, 0.0)
        if needs_mask:
            idx = (lax.broadcasted_iota(jnp.int32, (rows, LANE), 0) * LANE
                   + lax.broadcasted_iota(jnp.int32, (rows, LANE), 1))
            valid = (base_elem + r0 * LANE + idx) < n_elems
            sp_neg = jnp.where(valid, sp_neg, 0.0)
            lab = jnp.where(valid, lab, 0.0)
            conf = jnp.where(valid, conf, 0.0)
        return _fold8(sp_neg), _fold8(lab), _fold8(conf)

    n_full = tm // chunk
    rem = tm - n_full * chunk

    parts = (jnp.zeros((8, LANE), jnp.float32),) * 3
    if n_full == 1:
        p = process(0, chunk)
        parts = tuple(a + b for a, b in zip(parts, p))
    elif n_full > 1:
        def body(c, carry):
            r0 = pl.multiple_of(c * chunk, chunk)
            p = process(r0, chunk)
            return tuple(a + b for a, b in zip(carry, p))
        parts = lax.fori_loop(0, n_full, body, parts, unroll=True)
    if rem:
        p = process(n_full * chunk, rem)
        parts = tuple(a + b for a, b in zip(parts, p))

    # Only three (8,128) RMWs per grid step — negligible store-slot pressure.
    acc_sp_ref[...] += parts[0]
    acc_lab_ref[...] += parts[1]
    acc_conf_ref[...] += parts[2]

    @pl.when(i == pl.num_programs(0) - 1)
    def _finalize():
        # Single XLU reduction pass at the very end (3 vregs total).
        s_sp_neg = jnp.sum(acc_sp_ref[...])
        s_lab = jnp.sum(acc_lab_ref[...])
        s_conf = jnp.sum(acc_conf_ref[...])
        inv_n = 1.0 / n_elems
        y_pos = s_sp_neg * inv_n                  # mean softplus(-labeled)
        y_neg = (s_sp_neg + s_lab) * inv_n        # softplus(x) = softplus(-x) + x
        mean_conf = s_conf * inv_n
        out_ref[0, 0] = mean_conf * y_pos + (1.0 - mean_conf) * y_neg


def pn_loss(conf, labeled):
    """conf, labeled: same-shape arrays (e.g. NCHW). Returns scalar f32."""
    assert conf.shape == labeled.shape, "conf and labeled must share a shape"
    n = conf.size
    assert n > 0

    m_rows = pl.cdiv(n, LANE)
    conf_flat = conf.reshape(-1)
    lab_flat = labeled.reshape(-1)

    lane_pad = m_rows * LANE - n
    if lane_pad:
        # Only a <=127-element pad so the lane-dense (m_rows, 128) reshape is
        # legal; the padded elements are masked out inside the kernel.
        # TODO(synk): stream the flat tail directly to avoid even this copy.
        conf_flat = jnp.pad(conf_flat, (0, lane_pad))
        lab_flat = jnp.pad(lab_flat, (0, lane_pad))

    # Keep native dtype; the (free) f32 cast happens on the VPU inside the kernel.
    conf2 = conf_flat.reshape(m_rows, LANE)
    lab2 = lab_flat.reshape(m_rows, LANE)

    if m_rows <= MAX_TM:
        tm = m_rows              # single block == full first dim: always a legal tile
    else:
        tm = MAX_TM              # multiple of 8/16/32; ragged last block is masked
    num_blocks = pl.cdiv(m_rows, tm)
    chunk = tm if tm < 8 else min(CHUNK_ROWS, _round_down8(tm))
    needs_mask = (num_blocks * tm * LANE) != n

    out = pl.pallas_call(
        functools.partial(_pnloss_kernel, n_elems=int(n), tm=tm, chunk=chunk,
                          needs_mask=needs_mask),
        out_shape=jax.ShapeDtypeStruct((1, 1), jnp.float32),
        grid_spec=pltpu.PrefetchScalarGridSpec(
            num_scalar_prefetch=0,
            grid=(num_blocks,),
            in_specs=[
                pl.BlockSpec((tm, LANE), lambda i: (i, 0)),
                pl.BlockSpec((tm, LANE), lambda i: (i, 0)),
            ],
            out_specs=pl.BlockSpec(memory_space=pltpu.MemorySpace.SMEM),
            scratch_shapes=[
                pltpu.VMEM((8, LANE), jnp.float32),   # sum softplus(-labeled)
                pltpu.VMEM((8, LANE), jnp.float32),   # sum labeled
                pltpu.VMEM((8, LANE), jnp.float32),   # sum conf
            ],
        ),
        compiler_params=pltpu.CompilerParams(
            dimension_semantics=("arbitrary",),
            vmem_limit_bytes=32 * 1024 * 1024,
        ),
    )(conf2, lab2)
    return out[0, 0]


def pn_loss_ref(conf, labeled):
    """Pure-JAX reference mirroring the PyTorch forward (stable softplus)."""
    y_pos = jnp.mean(jax.nn.softplus(-labeled))
    y_neg = jnp.mean(jax.nn.softplus(labeled))
    return jnp.mean(conf * y_pos + (1.0 - conf) * y_neg)


if __name__ == "__main__":
    key = jax.random.PRNGKey(0)
    k1, k2 = jax.random.split(key)
    # conf in [0,1] (confidence map), labeled are raw logits — both NCHW.
    conf = jax.random.uniform(k1, (2, 4, 16, 16), dtype=jnp.float32)
    labeled = jax.random.normal(k2, (2, 4, 16, 16), dtype=jnp.float32) * 2.0

    out = pn_loss(conf, labeled)
    out = jax.block_until_ready(out)

    ref = pn_loss_ref(conf, labeled)
    assert jnp.allclose(out, ref, rtol=1e-5, atol=1e-5), (out, ref)
    print("KERNEL_OK")
</pallas_src>

<mosaic_0001>
module attributes {stable_mosaic.version = 11 : i64} {
  func.func @_pnloss_kernel(%arg0: i32, %arg1: memref<16x128xf32, #tpu.memory_space<vmem>>, %arg2: memref<16x128xf32, #tpu.memory_space<vmem>>, %arg3: memref<1x1xf32, #tpu.memory_space<smem>>, %arg4: memref<8x128xf32, #tpu.memory_space<vmem>>, %arg5: memref<8x128xf32, #tpu.memory_space<vmem>>, %arg6: memref<8x128xf32, #tpu.memory_space<vmem>>) attributes {dimension_semantics = [#tpu.dimension_semantics<arbitrary>], iteration_bounds = array<i64: 1>, scalar_prefetch = 0 : i64, scratch_operands = 3 : i64, tpu.core_type = #tpu.core_type<tc>, window_params = [{transform_indices = @transform_0, window_bounds = array<i64: 16, 128>}, {transform_indices = @transform_1, window_bounds = array<i64: 16, 128>}, {transform_indices = @transform_2, window_bounds = array<i64: 1, 1>}]} {
    %c0_i32 = arith.constant 0 : i32
    %0 = arith.cmpi eq, %arg0, %c0_i32 : i32
    %1 = arith.extui %0 : i1 to i32
    %c0_i32_0 = arith.constant 0 : i32
    %2 = arith.cmpi ne, %1, %c0_i32_0 : i32
    scf.if %2 {
      %cst_24 = arith.constant 0.000000e+00 : f32
      %37 = vector.broadcast %cst_24 : f32 to vector<8x128xf32>
      %c0_25 = arith.constant 0 : index
      %c0_26 = arith.constant 0 : index
      %38 = vector.load %arg4[%c0_25, %c0_26] : memref<8x128xf32, #tpu.memory_space<vmem>>, vector<8x128xf32>
      tpu.vector_store %arg4[%c0_25, %c0_26], %37 {strides = array<i32>} : memref<8x128xf32, #tpu.memory_space<vmem>>, vector<8x128xf32>,
      %cst_27 = arith.constant 0.000000e+00 : f32
      %39 = vector.broadcast %cst_27 : f32 to vector<8x128xf32>
      %c0_28 = arith.constant 0 : index
      %c0_29 = arith.constant 0 : index
      %40 = vector.load %arg5[%c0_28, %c0_29] : memref<8x128xf32, #tpu.memory_space<vmem>>, vector<8x128xf32>
      tpu.vector_store %arg5[%c0_28, %c0_29], %39 {strides = array<i32>} : memref<8x128xf32, #tpu.memory_space<vmem>>, vector<8x128xf32>,
      %cst_30 = arith.constant 0.000000e+00 : f32
      %41 = vector.broadcast %cst_30 : f32 to vector<8x128xf32>
      %c0_31 = arith.constant 0 : index
      %c0_32 = arith.constant 0 : index
      %42 = vector.load %arg6[%c0_31, %c0_32] : memref<8x128xf32, #tpu.memory_space<vmem>>, vector<8x128xf32>
      tpu.vector_store %arg6[%c0_31, %c0_32], %41 {strides = array<i32>} : memref<8x128xf32, #tpu.memory_space<vmem>>, vector<8x128xf32>,
    } else {
    }
    %cst = arith.constant 0.000000e+00 : f32
    %3 = vector.broadcast %cst : f32 to vector<8x128xf32>
    %c0 = arith.constant 0 : index
    %c0_1 = arith.constant 0 : index
    %4 = vector.load %arg2[%c0, %c0_1] : memref<16x128xf32, #tpu.memory_space<vmem>>, vector<16x128xf32>
    %c0_2 = arith.constant 0 : index
    %c0_3 = arith.constant 0 : index
    %5 = vector.load %arg1[%c0_2, %c0_3] : memref<16x128xf32, #tpu.memory_space<vmem>>, vector<16x128xf32>
    %6 = math.absf %4 : vector<16x128xf32>
    %cst_4 = arith.constant 0.000000e+00 : f32
    %7 = vector.broadcast %cst_4 : f32 to vector<16x128xf32>
    %8 = arith.subf %7, %6 : vector<16x128xf32>
    %9 = math.exp %8 : vector<16x128xf32>
    %10 = math.log1p %9 : vector<16x128xf32>
    %cst_5 = arith.constant 0.000000e+00 : f32
    %11 = vector.broadcast %cst_5 : f32 to vector<16x128xf32>
    %12 = arith.subf %11, %4 : vector<16x128xf32>
    %cst_6 = arith.constant 0.000000e+00 : f32
    %13 = vector.broadcast %cst_6 : f32 to vector<16x128xf32>
    %14 = arith.maximumf %12, %13 : vector<16x128xf32>
    %15 = arith.addf %10, %14 : vector<16x128xf32>
    %16 = vector.shape_cast %15 : vector<16x128xf32> to vector<2x8x128xf32>
    %cst_7 = arith.constant dense<0.000000e+00> : vector<8x128xf32>
    %17 = vector.multi_reduction <add>, %16, %cst_7 [0] : vector<2x8x128xf32> to vector<8x128xf32>
    %18 = vector.shape_cast %4 : vector<16x128xf32> to vector<2x8x128xf32>
    %cst_8 = arith.constant dense<0.000000e+00> : vector<8x128xf32>
    %19 = vector.multi_reduction <add>, %18, %cst_8 [0] : vector<2x8x128xf32> to vector<8x128xf32>
    %20 = vector.shape_cast %5 : vector<16x128xf32> to vector<2x8x128xf32>
    %cst_9 = arith.constant dense<0.000000e+00> : vector<8x128xf32>
    %21 = vector.multi_reduction <add>, %20, %cst_9 [0] : vector<2x8x128xf32> to vector<8x128xf32>
    %22 = arith.addf %3, %17 : vector<8x128xf32>
    %23 = arith.addf %3, %19 : vector<8x128xf32>
    %24 = arith.addf %3, %21 : vector<8x128xf32>
    %c0_10 = arith.constant 0 : index
    %c0_11 = arith.constant 0 : index
    %25 = vector.load %arg4[%c0_10, %c0_11] : memref<8x128xf32, #tpu.memory_space<vmem>>, vector<8x128xf32>
    %26 = arith.addf %25, %22 : vector<8x128xf32>
    %c0_12 = arith.constant 0 : index
    %c0_13 = arith.constant 0 : index
    %27 = vector.load %arg4[%c0_12, %c0_13] : memref<8x128xf32, #tpu.memory_space<vmem>>, vector<8x128xf32>
    tpu.vector_store %arg4[%c0_12, %c0_13], %26 {strides = array<i32>} : memref<8x128xf32, #tpu.memory_space<vmem>>, vector<8x128xf32>,
    %c0_14 = arith.constant 0 : index
    %c0_15 = arith.constant 0 : index
    %28 = vector.load %arg5[%c0_14, %c0_15] : memref<8x128xf32, #tpu.memory_space<vmem>>, vector<8x128xf32>
    %29 = arith.addf %28, %23 : vector<8x128xf32>
    %c0_16 = arith.constant 0 : index
    %c0_17 = arith.constant 0 : index
    %30 = vector.load %arg5[%c0_16, %c0_17] : memref<8x128xf32, #tpu.memory_space<vmem>>, vector<8x128xf32>
    tpu.vector_store %arg5[%c0_16, %c0_17], %29 {strides = array<i32>} : memref<8x128xf32, #tpu.memory_space<vmem>>, vector<8x128xf32>,
    %c0_18 = arith.constant 0 : index
    %c0_19 = arith.constant 0 : index
    %31 = vector.load %arg6[%c0_18, %c0_19] : memref<8x128xf32, #tpu.memory_space<vmem>>, vector<8x128xf32>
    %32 = arith.addf %31, %24 : vector<8x128xf32>
    %c0_20 = arith.constant 0 : index
    %c0_21 = arith.constant 0 : index
    %33 = vector.load %arg6[%c0_20, %c0_21] : memref<8x128xf32, #tpu.memory_space<vmem>>, vector<8x128xf32>
    tpu.vector_store %arg6[%c0_20, %c0_21], %32 {strides = array<i32>} : memref<8x128xf32, #tpu.memory_space<vmem>>, vector<8x128xf32>,
    %c0_i32_22 = arith.constant 0 : i32
    %34 = arith.cmpi eq, %arg0, %c0_i32_22 : i32
    %35 = arith.extui %34 : i1 to i32
    %c0_i32_23 = arith.constant 0 : i32
    %36 = arith.cmpi ne, %35, %c0_i32_23 : i32
    scf.if %36 {
      %c0_24 = arith.constant 0 : index
      %c0_25 = arith.constant 0 : index
      %37 = vector.load %arg4[%c0_24, %c0_25] : memref<8x128xf32, #tpu.memory_space<vmem>>, vector<8x128xf32>
      %38 = vector.shape_cast %37 : vector<8x128xf32> to vector<1x8x128xf32>
      %cst_26 = arith.constant dense<0.000000e+00> : vector<1xf32>
      %39 = vector.multi_reduction <add>, %38, %cst_26 [1, 2] : vector<1x8x128xf32> to vector<1xf32>
      %40 = vector.shape_cast %39 : vector<1xf32> to vector<1x1x1xf32>
      %41 = vector.extract %40[0, 0, 0] : f32 from vector<1x1x1xf32>
      %c0_27 = arith.constant 0 : index
      %c0_28 = arith.constant 0 : index
      %42 = vector.load %arg5[%c0_27, %c0_28] : memref<8x128xf32, #tpu.memory_space<vmem>>, vector<8x128xf32>
      %43 = vector.shape_cast %42 : vector<8x128xf32> to vector<1x8x128xf32>
      %cst_29 = arith.constant dense<0.000000e+00> : vector<1xf32>
      %44 = vector.multi_reduction <add>, %43, %cst_29 [1, 2] : vector<1x8x128xf32> to vector<1xf32>
      %45 = vector.shape_cast %44 : vector<1xf32> to vector<1x1x1xf32>
      %46 = vector.extract %45[0, 0, 0] : f32 from vector<1x1x1xf32>
      %c0_30 = arith.constant 0 : index
      %c0_31 = arith.constant 0 : index
      %47 = vector.load %arg6[%c0_30, %c0_31] : memref<8x128xf32, #tpu.memory_space<vmem>>, vector<8x128xf32>
      %48 = vector.shape_cast %47 : vector<8x128xf32> to vector<1x8x128xf32>
      %cst_32 = arith.constant dense<0.000000e+00> : vector<1xf32>
      %49 = vector.multi_reduction <add>, %48, %cst_32 [1, 2] : vector<1x8x128xf32> to vector<1xf32>
      %50 = vector.shape_cast %49 : vector<1xf32> to vector<1x1x1xf32>
      %51 = vector.extract %50[0, 0, 0] : f32 from vector<1x1x1xf32>
      %cst_33 = arith.constant 4.8828125E-4 : f32
      %52 = arith.mulf %41, %cst_33 : f32
      %53 = arith.addf %41, %46 : f32
      %cst_34 = arith.constant 4.8828125E-4 : f32
      %54 = arith.mulf %53, %cst_34 : f32
      %cst_35 = arith.constant 4.8828125E-4 : f32
      %55 = arith.mulf %51, %cst_35 : f32
      %56 = arith.mulf %55, %52 : f32
      %cst_36 = arith.constant 1.000000e+00 : f32
      %57 = arith.subf %cst_36, %55 : f32
      %58 = arith.mulf %57, %54 : f32
      %59 = arith.addf %56, %58 : f32
      %c0_37 = arith.constant 0 : index
      %c0_38 = arith.constant 0 : index
      %60 = memref.load %arg3[%c0_37, %c0_38] : memref<1x1xf32, #tpu.memory_space<smem>>
      memref.store %59, %arg3[%c0_37, %c0_38] : memref<1x1xf32, #tpu.memory_space<smem>>
    } else {
    }
    return
  }
  func.func @transform_0(%arg0: i32) -> (i32, i32) {
    %c0_i32 = arith.constant 0 : i32
    %c0_i32_0 = arith.constant 0 : i32
    return %arg0, %c0_i32 : i32, i32
  }
  func.func @transform_1(%arg0: i32) -> (i32, i32) {
    %c0_i32 = arith.constant 0 : i32
    %c0_i32_0 = arith.constant 0 : i32
    return %arg0, %c0_i32 : i32, i32
  }
  func.func @transform_2(%arg0: i32) -> (i32, i32) {
    %c0_i32 = arith.constant 0 : i32
    %c0_i32_0 = arith.constant 0 : i32
    %c0_i32_1 = arith.constant 0 : i32
    return %c0_i32, %c0_i32_0 : i32, i32
  }
}

</mosaic_0001>

<llo_original>
// kernel: tpu_custom_call.1
$region0: #{tpu_custom_call.1}
  #allocation0 [shape = 'u32[]', space=smem, size = 0x4, offset = 0x4, fixed_abs, tag = 'smem constant byte address 0x4 - core index']
  #allocation1 [shape = 'u32[144,128]{1,0:T(1,128)}', space=vmem, size = 0x12000, scoped, tag = 'internal scratch']
  #allocation2 [shape = 'f32[8,128]{1,0:T(8,128)}', space=vmem, size = 0x1000, scoped, tag = 'scratch operand']
  #allocation3 [shape = 'f32[8,128]{1,0:T(8,128)}', space=vmem, size = 0x1000, scoped, tag = 'scratch operand']
  #allocation4 [shape = 'f32[8,128]{1,0:T(8,128)}', space=vmem, size = 0x1000, scoped, tag = 'scratch operand']
  %s0 = inlined_call_operand.hbm [shape: f32[16,128], index: 0, kind: input, shape index: {}]
  %s1 = inlined_call_operand.hbm [shape: f32[16,128], index: 1, kind: input, shape index: {}]
  %s2 = inlined_call_operand.hbm [shape: f32[1,1], index: 2, kind: output, shape index: {}]
  %s3 = sld [smem:[#allocation0]]
  $region34: #{tpu_custom_call.1} parent=0
    _
  %s5 = ssub.s32 1, %s3
  %s6 = scalar_select 0, %s5, %s3
  $region1: #{tpu_custom_call.1} parent=0
    #allocation5 [shape = 'u8[8192]{0}', space=vmem, size = 0x2000, scoped, tag = 'input window, operand 0, single buffered']
    #allocation6 [shape = 's32[1]{0}', space=sflag, size = 0x4, scoped, tag = 'scoped memory for tpu_custom_call.1']
    #allocation7 [shape = 's32[1]{0}', space=sflag, size = 0x4, scoped, tag = 'scoped memory for tpu_custom_call.1']
    #allocation8 [shape = 'u8[8192]{0}', space=vmem, size = 0x2000, scoped, tag = 'input window, operand 1, single buffered']
    #allocation9 [shape = 's32[1]{0}', space=sflag, size = 0x4, scoped, tag = 'scoped memory for tpu_custom_call.1']
    #allocation10 [shape = 'u8[512]{0}', space=smem, size = 0x200, scoped, tag = 'output window, operand 0, single buffered']
    %7 = vsyncpa [#allocation6], 0
    %8 = vsyncpa [#allocation9], 0
    %9 = vsyncpa [#allocation7], 0
    // Predicated region
    $region2: #{tpu_custom_call.1} parent=1 // pred_check
      _
    $region3: #{tpu_custom_call.1} parent=1 // pred_check_branch
      %11 = sbr.rel (0) target = $region5
    $region4: #{tpu_custom_call.1} parent=1 // pred_region
      %s13 = ssub.s32 256, 256
      %14 = vsyncadd [#allocation6], %s13
      %s15 = sshll.u32 [#allocation5], 4
      %s16 = int_to_ptr.vmem [resolvable:$true] %s15
      %21 = dma.hbm_to_vmem [thread:$0]  %s0, 256, %s16, [#allocation6], 128, 128, 8
    $region5: #{tpu_custom_call.1} parent=1 // pred_fallthru
      _
    // Predicated region
    $region6: #{tpu_custom_call.1} parent=1 // pred_check
      _
    $region7: #{tpu_custom_call.1} parent=1 // pred_check_branch
      %23 = sbr.rel (0) target = $region9
    $region8: #{tpu_custom_call.1} parent=1 // pred_region
      %s25 = ssub.s32 256, 256
      %26 = vsyncadd [#allocation9], %s25
      %s27 = sshll.u32 [#allocation8], 4
      %s28 = int_to_ptr.vmem [resolvable:$true] %s27
      %33 = dma.hbm_to_vmem [thread:$0]  %s1, 256, %s28, [#allocation9], 128, 128, 8
    $region9: #{tpu_custom_call.1} parent=1 // pred_fallthru
      _
    // Predicated region
    $region10: #{tpu_custom_call.1} parent=1 // pred_check
      _
    $region11: #{tpu_custom_call.1} parent=1 // pred_check_branch
      %35 = sbr.rel (0) target = $region13
    $region12: #{tpu_custom_call.1} parent=1 // pred_region
      %36 = dma.done [#allocation6], 256
    $region13: #{tpu_custom_call.1} parent=1 // pred_fallthru
      _
    // Predicated region
    $region14: #{tpu_custom_call.1} parent=1 // pred_check
      _
    $region15: #{tpu_custom_call.1} parent=1 // pred_check_branch
      %38 = sbr.rel (0) target = $region17
    $region16: #{tpu_custom_call.1} parent=1 // pred_region
      %39 = dma.done [#allocation9], 256
    $region17: #{tpu_custom_call.1} parent=1 // pred_fallthru
      _
    %p40 = scmp.eq.s32.totalorder 0, 0
    // Predicated region
    $region18: #{tpu_custom_call.1} parent=1 // pred_check
      %p41 = pneg %p40
    $region19: #{tpu_custom_call.1} parent=1 // pred_check_branch
      %43 = sbr.rel (%p41) target = $region21
    $region20: #{tpu_custom_call.1} parent=1 // pred_region
      %44 = vst [vmem:[#allocation2] sm:$0xff] 0.0
      %45 = vst [vmem:[#allocation3] sm:$0xff] 0.0
      %46 = vst [vmem:[#allocation4] sm:$0xff] 0.0
    $region21: #{tpu_custom_call.1} parent=1 // pred_fallthru
      _
    %v47 = vld [vmem:[#allocation8] sm:$0xff]
    %v48 = vld [vmem:[#allocation8 + $0x8] sm:$0xff]
    %v49 = vld [vmem:[#allocation5] sm:$0xff]
    %v50 = vld [vmem:[#allocation5 + $0x8] sm:$0xff]
    %v51 = vand.u32 2147483647, %v47
    %v52 = vand.u32 2147483647, %v48
    %v53 = vsub.f32 0.0, %v51
    %v54 = vsub.f32 0.0, %v52
    %v55 = vmul.f32 %v53, 1.442695
    %v56 = vpow.pop %v55
    %v57 = vmul.f32 %v54, 1.442695
    %v58 = vpow.pop %v57
    %v59 = vadd.f32 %v56, 1.0
    %v60 = vlog2.pop %v59
    %v61 = vmul.f32 %v60, 0.6931472
    %v62 = vmul.f32 -0.5, %v56
    %v63 = vadd.f32 %v62, 1.0
    %v64 = vmul.f32 %v63, %v56
    %v65 = vand.u32 2147483647, %v56
    %vm66 = vcmp.lt.f32.partialorder %v65, 0.0004427343
    %v67 = vsel %vm66, %v64, %v61
    %v68 = vadd.f32 %v58, 1.0
    %v69 = vlog2.pop %v68
    %v70 = vmul.f32 %v69, 0.6931472
    %v71 = vmul.f32 -0.5, %v58
    %v72 = vadd.f32 %v71, 1.0
    %v73 = vmul.f32 %v72, %v58
    %v74 = vand.u32 2147483647, %v58
    %vm75 = vcmp.lt.f32.partialorder %v74, 0.0004427343
    %v76 = vsel %vm75, %v73, %v70
    %v77 = vsub.f32 0.0, %v47
    %v78 = vsub.f32 0.0, %v48
    %v79 = vmax.f32 %v77, 0.0
    %v80 = vmax.f32 %v78, 0.0
    %v81 = vadd.f32 %v67, %v79
    %v82 = vadd.f32 %v76, %v80
    %v83 = vadd.f32 %v81, %v82
    %v84 = vadd.f32 %v47, %v48
    %v85 = vadd.f32 %v49, %v50
    %v86 = vadd.f32 %v83, 0.0
    %v87 = vadd.f32 %v84, 0.0
    %v88 = vadd.f32 %v85, 0.0
    %v89 = vld [vmem:[#allocation2] sm:$0xff]
    %v90 = vadd.f32 %v89, %v86
    %91 = vst [vmem:[#allocation2] sm:$0xff] %v90
    %v92 = vld [vmem:[#allocation3] sm:$0xff]
    %v93 = vadd.f32 %v92, %v87
    %94 = vst [vmem:[#allocation3] sm:$0xff] %v93
    %v95 = vld [vmem:[#allocation4] sm:$0xff]
    %v96 = vadd.f32 %v95, %v88
    %97 = vst [vmem:[#allocation4] sm:$0xff] %v96
    // Predicated region
    $region22: #{tpu_custom_call.1} parent=1 // pred_check
      %p98 = pneg %p40
    $region23: #{tpu_custom_call.1} parent=1 // pred_check_branch
      %100 = sbr.rel (%p98) target = $region25
    $region24: #{tpu_custom_call.1} parent=1 // pred_region
      %v101 = vld [vmem:[#allocation2] sm:$0xff]
      %102 = vadd.xlane.f32.xlu0 %v101
      %v103 = vpop.xlane.xlu0 %102
      %v104 = vrot.slane %v103, 4
      %v105 = vadd.f32 %v103, %v104
      %v106 = vrot.slane %v105, 2
      %v107 = vadd.f32 %v105, %v106
      %v108 = vrot.slane %v107, 1
      %v109 = vadd.f32 %v107, %v108
      %s110 = vtos %v109
      %v111 = vld [vmem:[#allocation3] sm:$0xff]
      %112 = vadd.xlane.f32.xlu0 %v111
      %v113 = vpop.xlane.xlu0 %112
      %v114 = vrot.slane %v113, 4
      %v115 = vadd.f32 %v113, %v114
      %v116 = vrot.slane %v115, 2
      %v117 = vadd.f32 %v115, %v116
      %v118 = vrot.slane %v117, 1
      %v119 = vadd.f32 %v117, %v118
      %s120 = vtos %v119
      %v121 = vld [vmem:[#allocation4] sm:$0xff]
      %122 = vadd.xlane.f32.xlu0 %v121
      %v123 = vpop.xlane.xlu0 %122
      %v124 = vrot.slane %v123, 4
      %v125 = vadd.f32 %v123, %v124
      %v126 = vrot.slane %v125, 2
      %v127 = vadd.f32 %v125, %v126
      %v128 = vrot.slane %v127, 1
      %v129 = vadd.f32 %v127, %v128
      %s130 = vtos %v129
      %s131 = smul.f32 %s110, 0.00048828125
      %s132 = sadd.f32 %s110, %s120
      %s133 = smul.f32 %s132, 0.00048828125
      %s134 = smul.f32 %s130, 0.00048828125
      %s135 = smul.f32 %s134, %s131
      %s136 = ssub.f32 1.0, %s134
      %s137 = smul.f32 %s136, %s133
      %s138 = sadd.f32 %s135, %s137
      %s139 = scalar_lea.smem [#allocation10], 0
      %140 = sst [smem:[%s139]] %s138
    $region25: #{tpu_custom_call.1} parent=1 // pred_fallthru
      _
    // Predicated region
    $region26: #{tpu_custom_call.1} parent=1 // pred_check
      _
    $region27: #{tpu_custom_call.1} parent=1 // pred_check_branch
      %142 = sbr.rel (0) target = $region29
    $region28: #{tpu_custom_call.1} parent=1 // pred_region
      %s144 = ssub.s32 16, 16
      %145 = vsyncadd [#allocation7], %s144
      %148 = dma.smem_to_hbm [#allocation10], 16, %s2, [#allocation7]
    $region29: #{tpu_custom_call.1} parent=1 // pred_fallthru
      _
    // Predicated region
    $region30: #{tpu_custom_call.1} parent=1 // pred_check
      _
    $region31: #{tpu_custom_call.1} parent=1 // pred_check_branch
      %150 = sbr.rel (0) target = $region33
    $region32: #{tpu_custom_call.1} parent=1 // pred_region
      %151 = dma.done [#allocation7], 16
    $region33: #{tpu_custom_call.1} parent=1 // pred_fallthru
      _
    %152 = sfence
    %153 = vsyncpa [#allocation6], 1
    %154 = vsyncpa [#allocation9], 1
    %155 = vsyncpa [#allocation7], 1

</llo_original>
